<compile_context>
chip_gen: v5e
topology: v5e:2x2
jax: 0.10.0
libtpu: 0.0.40
codegen_flags: <defaults>
</compile_context>

<pallas_src>
import jax
import jax.numpy as jnp
from jax.experimental import pallas as pl
from jax.experimental.pallas import tpu as pltpu


# ----------------------------------------------------------------------------
# Fused kernel: conv1 + bias + ReLU + conv2 + bias + ReLU, single invocation.
# ----------------------------------------------------------------------------
def fused_net_kernel(lhs1_ref, r1_ref, b1_ref, r2_ref, b2_ref,
                     y1_ref, y2_ref, pad_ref):
    # lhs1_ref : (N*H, K1p)           pre-built conv1 LHS (K zero-padded to 128x)
    # r1_ref   : (K1p, W*Cout1)       block-Toeplitz conv1 weight (W-halo folded in)
    # b1_ref   : (1, W*Cout1)
    # r2_ref   : (3*W*Cout1, W*Cout2) block-Toeplitz conv2 weight
    # b2_ref   : (1, W*Cout2)
    # y1_ref   : (N, H, W*Cout1)      relu(conv1(x))       -> list_x[1]
    # y2_ref   : (N, H, W*Cout2)      relu(conv2(relu1))   -> final output
    # pad_ref  : VMEM scratch (N, H+2, W*Cout1)  H-halo-padded intermediate
    #            (exactly 128 lanes -> unmasked stores)
    n, hp, wc1 = pad_ref.shape
    h = hp - 2
    wc2 = y2_ref.shape[-1]

    # ---- layer 0: Conv2d(Cin->Cout1, 3, padding=1) as ONE MXU matmul.
    a1 = jnp.dot(lhs1_ref[...], r1_ref[...], preferred_element_type=jnp.float32)
    # PyTorch does x = (module(x) + module(Parameter(x))) / 2; both convs are
    # numerically identical, so the average is an identity and is dropped.
    # TODO(synk): nn.Parameter registration via setattr/exec is stateful
    # bookkeeping with no effect on the forward value; not modeled.

    # ---- layer 1: ReLU (list_x entry), lane-dense unmasked store.
    y1 = jnp.maximum(a1 + b1_ref[...], 0.0)          # (N*H, W*Cout1)
    y1_3d = y1.reshape(n, h, wc1)
    y1_ref[...] = y1_3d

    # ---- re-pad in VMEM: zero ONLY the two H-halo rows, write interior once.
    zero_row = jnp.zeros((n, 1, wc1), jnp.float32)
    pad_ref[:, 0:1, :] = zero_row
    pad_ref[:, hp - 1:hp, :] = zero_row
    pad_ref[:, 1:1 + h, :] = y1_3d
    y1p = pad_ref[...]

    # ---- layer 2: Conv2d(Cout1->Cout2, 3, padding=1) — single K=3*128 matmul.
    # Each kh slab is a full 128-lane vreg row, so the concat is pure placement.
    lhs2 = jnp.concatenate(
        [y1p[:, kh:kh + h, :].reshape(n * h, wc1) for kh in range(3)], axis=-1)
    a2 = jnp.dot(lhs2, r2_ref[...], preferred_element_type=jnp.float32)

    # ---- layer 3: ReLU (final output)
    y2_ref[...] = jnp.maximum(a2 + b2_ref[...], 0.0).reshape(n, h, wc2)


# ----------------------------------------------------------------------------
# One-time parameter preparation (pure jnp, jit/const-fold friendly).
# ----------------------------------------------------------------------------
def _toeplitz_weight(w_hwio, out_w, k_pad=None):
    """(3,3,Cin,Cout) HWIO conv weight -> (3*W*Cin, W*Cout) block-Toeplitz RHS.

    The W-halo is folded into the weight: taps that would read a padded W
    column simply have no corresponding LHS lane (zero contribution).
    """
    w_hwio = jnp.asarray(w_hwio, jnp.float32)
    _, _, cin, cout = w_hwio.shape
    w_in = jnp.arange(out_w)
    x = jnp.arange(out_w)
    kw = jnp.arange(3)
    # sel[kw, w_in, x] = 1 iff input column w_in feeds output column x at tap kw
    sel = (w_in[None, :, None] == x[None, None, :] + kw[:, None, None] - 1)
    sel = sel.astype(jnp.float32)
    # r[kh, w_in, ci, x, co] = sum_kw sel[kw, w_in, x] * w[kh, kw, ci, co]
    r = jnp.einsum('kwx,hkio->hwixo', sel, w_hwio)
    r = r.reshape(3 * out_w * cin, out_w * cout)
    if k_pad is not None and k_pad > r.shape[0]:
        r = jnp.pad(r, ((0, k_pad - r.shape[0]), (0, 0)))
    return r


def prepare_net_params(layers, width):
    """Expand conv weights to block-Toeplitz RHS and lane-tile biases ONCE."""
    assert len(layers) == 4 and layers[0][0] == "conv" and layers[2][0] == "conv"
    _, w1, b1 = layers[0]
    _, w2, b2 = layers[2]
    cin = w1.shape[2]
    cout1 = w1.shape[3]
    cout2 = w2.shape[3]
    k1 = 3 * width * cin
    k1p = ((k1 + 127) // 128) * 128              # round K up to full 128-lane vregs
    return {
        "r1": _toeplitz_weight(w1, width, k_pad=k1p),     # (K1p,        W*Cout1)
        "b1": jnp.tile(jnp.asarray(b1, jnp.float32), width).reshape(1, width * cout1),
        "r2": _toeplitz_weight(w2, width),                # (3*W*Cout1,  W*Cout2)
        "b2": jnp.tile(jnp.asarray(b2, jnp.float32), width).reshape(1, width * cout2),
    }


# ----------------------------------------------------------------------------
# Forward wrapper (jittable): layout plumbing in XLA + one fused pallas_call.
# ----------------------------------------------------------------------------
def net_forward(x_nchw, params):
    n, cin, h, w = x_nchw.shape
    r1, b1d, r2, b2d = params["r1"], params["b1"], params["r2"], params["b2"]
    k1p = r1.shape[0]
    wcout1 = r1.shape[1]
    wcout2 = r2.shape[1]
    cout1 = wcout1 // w
    cout2 = wcout2 // w

    # Conv1 LHS built in XLA: NCHW -> NHWC, pad H only, stack the 3 kh-shifted
    # row slabs along lanes -> (N*H, 3*W*Cin), then zero-pad K to K1p.
    x_nhwc = jnp.transpose(x_nchw, (0, 2, 3, 1)).astype(jnp.float32)
    xp = jnp.pad(x_nhwc, ((0, 0), (1, 1), (0, 0), (0, 0))).reshape(n, h + 2, w * cin)
    lhs1 = jnp.concatenate(
        [xp[:, kh:kh + h, :].reshape(n * h, w * cin) for kh in range(3)], axis=-1)
    if k1p > lhs1.shape[-1]:
        lhs1 = jnp.pad(lhs1, ((0, 0), (0, k1p - lhs1.shape[-1])))

    y1, y2 = pl.pallas_call(
        fused_net_kernel,
        out_shape=(jax.ShapeDtypeStruct((n, h, wcout1), jnp.float32),
                   jax.ShapeDtypeStruct((n, h, wcout2), jnp.float32)),
        scratch_shapes=[pltpu.VMEM((n, h + 2, wcout1), jnp.float32)],
    )(lhs1, r1, b1d, r2, b2d)

    # lane-dense (N, H, W*C) back to PyTorch NCHW
    x1 = jnp.transpose(y1.reshape(n, h, w, cout1), (0, 3, 1, 2))
    x2 = jnp.transpose(y2.reshape(n, h, w, cout2), (0, 3, 1, 2))
    return x2, [x_nchw, x1, x2]


# ----------------------------------------------------------------------------
# Deterministic parameters (PyTorch Conv2d OIHW init, converted to HWIO).
# ----------------------------------------------------------------------------
def make_params(key, cin, cout):
    k_w, k_b = jax.random.split(key)
    fan_in = cin * 3 * 3
    bound = 1.0 / (fan_in ** 0.5)
    w_oihw = jax.random.uniform(k_w, (cout, cin, 3, 3), jnp.float32,
                                minval=-bound, maxval=bound)
    b = jax.random.uniform(k_b, (cout,), jnp.float32,
                           minval=-bound, maxval=bound)
    w_hwio = jnp.transpose(w_oihw, (2, 3, 1, 0))          # (3, 3, Cin, Cout)
    return w_hwio, b


def reference_forward(x_nchw, layers):
    """Pure-JAX reference (lax conv) for correctness checking."""
    x = x_nchw
    list_x = [x]
    for i, layer in enumerate(layers):
        if i % 2 == 0:
            _, w_hwio, b = layer
            w_oihw = jnp.transpose(w_hwio, (3, 2, 0, 1))
            y = jax.lax.conv_general_dilated(
                x, w_oihw, window_strides=(1, 1), padding=((1, 1), (1, 1)),
                dimension_numbers=("NCHW", "OIHW", "NCHW"))
            y = y + b[None, :, None, None]
            x = (y + y) / 2.0
        else:
            x = jnp.maximum(x, 0.0)
            list_x.append(x)
    return x, list_x


if __name__ == "__main__":
    key = jax.random.PRNGKey(0)
    k_x, k_p1, k_p2 = jax.random.split(key, 3)

    # Net(seq=[Conv2d(4,8,3,pad=1), ReLU(), Conv2d(8,8,3,pad=1), ReLU()])
    w1, b1 = make_params(k_p1, cin=4, cout=8)
    w2, b2 = make_params(k_p2, cin=8, cout=8)
    layers = [("conv", w1, b1), ("relu",), ("conv", w2, b2), ("relu",)]

    x = jax.random.normal(k_x, (2, 4, 16, 16), jnp.float32)   # NCHW like PyTorch

    params = prepare_net_params(layers, width=16)   # once, outside the per-call path
    fwd = jax.jit(net_forward)                      # whole forward is jittable now

    out, list_x = fwd(x, params)
    out = jax.block_until_ready(out)
    list_x = [jax.block_until_ready(t) for t in list_x]

    # correctness check against a pure-JAX reference
    ref_out, ref_list = reference_forward(x, layers)
    assert out.shape == (2, 8, 16, 16)
    assert len(list_x) == 3
    assert jnp.allclose(out, ref_out, atol=1e-4, rtol=1e-4)
    for got, want in zip(list_x, ref_list):
        assert got.shape == want.shape
        assert jnp.allclose(got, want, atol=1e-4, rtol=1e-4)

    print("KERNEL_OK")
</pallas_src>

<mosaic_0001>
module attributes {stable_mosaic.version = 11 : i64} {
  func.func @fused_net_kernel(%arg0: memref<32x256xf32, #tpu.memory_space<vmem>>, %arg1: memref<256x128xf32, #tpu.memory_space<vmem>>, %arg2: memref<1x128xf32, #tpu.memory_space<vmem>>, %arg3: memref<384x128xf32, #tpu.memory_space<vmem>>, %arg4: memref<1x128xf32, #tpu.memory_space<vmem>>, %arg5: memref<2x16x128xf32, #tpu.memory_space<vmem>>, %arg6: memref<2x16x128xf32, #tpu.memory_space<vmem>>, %arg7: memref<2x18x128xf32, #tpu.memory_space<vmem>>) attributes {dimension_semantics = [], scalar_prefetch = 0 : i64, scratch_operands = 1 : i64, tpu.core_type = #tpu.core_type<tc>} {
    %c0 = arith.constant 0 : index
    %c0_0 = arith.constant 0 : index
    %0 = vector.load %arg0[%c0, %c0_0] : memref<32x256xf32, #tpu.memory_space<vmem>>, vector<32x256xf32>
    %c0_1 = arith.constant 0 : index
    %c0_2 = arith.constant 0 : index
    %1 = vector.load %arg1[%c0_1, %c0_2] : memref<256x128xf32, #tpu.memory_space<vmem>>, vector<256x128xf32>
    %cst = arith.constant dense<0.000000e+00> : vector<32x128xf32>
    %2 = tpu.matmul %0, %1, %cst {dimension_numbers = #tpu.dot_dimension_numbers<[1], [0], [0], [1], [0, 0, 1, 1], [], []>} : vector<32x256xf32>, vector<256x128xf32>, vector<32x128xf32> -> vector<32x128xf32>
    %c0_3 = arith.constant 0 : index
    %c0_4 = arith.constant 0 : index
    %3 = vector.load %arg2[%c0_3, %c0_4] : memref<1x128xf32, #tpu.memory_space<vmem>>, vector<1x128xf32>
    %4 = vector.broadcast %3 : vector<1x128xf32> to vector<32x128xf32>
    %5 = arith.addf %2, %4 : vector<32x128xf32>
    %cst_5 = arith.constant 0.000000e+00 : f32
    %6 = vector.broadcast %cst_5 : f32 to vector<32x128xf32>
    %7 = arith.maximumf %5, %6 : vector<32x128xf32>
    %8 = vector.shape_cast %7 : vector<32x128xf32> to vector<2x16x128xf32>
    %c0_6 = arith.constant 0 : index
    %c0_7 = arith.constant 0 : index
    %c0_8 = arith.constant 0 : index
    %9 = vector.load %arg5[%c0_6, %c0_7, %c0_8] : memref<2x16x128xf32, #tpu.memory_space<vmem>>, vector<2x16x128xf32>
    tpu.vector_store %arg5[%c0_6, %c0_7, %c0_8], %8 {strides = array<i32>} : memref<2x16x128xf32, #tpu.memory_space<vmem>>, vector<2x16x128xf32>,
    %cst_9 = arith.constant 0.000000e+00 : f32
    %10 = vector.broadcast %cst_9 : f32 to vector<2x1x128xf32>
    %c0_10 = arith.constant 0 : index
    %c0_11 = arith.constant 0 : index
    %c0_12 = arith.constant 0 : index
    %11 = vector.load %arg7[%c0_10, %c0_11, %c0_12] : memref<2x18x128xf32, #tpu.memory_space<vmem>>, vector<2x1x128xf32>
    tpu.vector_store %arg7[%c0_10, %c0_11, %c0_12], %10 {strides = array<i32>} : memref<2x18x128xf32, #tpu.memory_space<vmem>>, vector<2x1x128xf32>,
    %c0_13 = arith.constant 0 : index
    %c17 = arith.constant 17 : index
    %c0_14 = arith.constant 0 : index
    %12 = vector.load %arg7[%c0_13, %c17, %c0_14] : memref<2x18x128xf32, #tpu.memory_space<vmem>>, vector<2x1x128xf32>
    tpu.vector_store %arg7[%c0_13, %c17, %c0_14], %10 {strides = array<i32>} : memref<2x18x128xf32, #tpu.memory_space<vmem>>, vector<2x1x128xf32>,
    %c0_15 = arith.constant 0 : index
    %c1 = arith.constant 1 : index
    %c0_16 = arith.constant 0 : index
    %13 = vector.load %arg7[%c0_15, %c1, %c0_16] : memref<2x18x128xf32, #tpu.memory_space<vmem>>, vector<2x16x128xf32>
    tpu.vector_store %arg7[%c0_15, %c1, %c0_16], %8 {strides = array<i32>} : memref<2x18x128xf32, #tpu.memory_space<vmem>>, vector<2x16x128xf32>,
    %c0_17 = arith.constant 0 : index
    %c0_18 = arith.constant 0 : index
    %c0_19 = arith.constant 0 : index
    %14 = vector.load %arg7[%c0_17, %c0_18, %c0_19] : memref<2x18x128xf32, #tpu.memory_space<vmem>>, vector<2x18x128xf32>
    %15 = vector.extract_strided_slice %14 {offsets = [0, 0, 0], sizes = [2, 16, 128], strides = [1, 1, 1]} : vector<2x18x128xf32> to vector<2x16x128xf32>
    %16 = vector.shape_cast %15 : vector<2x16x128xf32> to vector<32x128xf32>
    %17 = vector.extract_strided_slice %14 {offsets = [0, 1, 0], sizes = [2, 16, 128], strides = [1, 1, 1]} : vector<2x18x128xf32> to vector<2x16x128xf32>
    %18 = vector.shape_cast %17 : vector<2x16x128xf32> to vector<32x128xf32>
    %19 = vector.extract_strided_slice %14 {offsets = [0, 2, 0], sizes = [2, 16, 128], strides = [1, 1, 1]} : vector<2x18x128xf32> to vector<2x16x128xf32>
    %20 = vector.shape_cast %19 : vector<2x16x128xf32> to vector<32x128xf32>
    %21 = tpu.concatenate %16, %18, %20 in 1 : vector<32x128xf32>, vector<32x128xf32>, vector<32x128xf32> -> vector<32x384xf32>
    %c0_20 = arith.constant 0 : index
    %c0_21 = arith.constant 0 : index
    %22 = vector.load %arg3[%c0_20, %c0_21] : memref<384x128xf32, #tpu.memory_space<vmem>>, vector<384x128xf32>
    %cst_22 = arith.constant dense<0.000000e+00> : vector<32x128xf32>
    %23 = tpu.matmul %21, %22, %cst_22 {dimension_numbers = #tpu.dot_dimension_numbers<[1], [0], [0], [1], [0, 0, 1, 1], [], []>} : vector<32x384xf32>, vector<384x128xf32>, vector<32x128xf32> -> vector<32x128xf32>
    %c0_23 = arith.constant 0 : index
    %c0_24 = arith.constant 0 : index
    %24 = vector.load %arg4[%c0_23, %c0_24] : memref<1x128xf32, #tpu.memory_space<vmem>>, vector<1x128xf32>
    %25 = vector.broadcast %24 : vector<1x128xf32> to vector<32x128xf32>
    %26 = arith.addf %23, %25 : vector<32x128xf32>
    %cst_25 = arith.constant 0.000000e+00 : f32
    %27 = vector.broadcast %cst_25 : f32 to vector<32x128xf32>
    %28 = arith.maximumf %26, %27 : vector<32x128xf32>
    %29 = vector.shape_cast %28 : vector<32x128xf32> to vector<2x16x128xf32>
    %c0_26 = arith.constant 0 : index
    %c0_27 = arith.constant 0 : index
    %c0_28 = arith.constant 0 : index
    %30 = vector.load %arg6[%c0_26, %c0_27, %c0_28] : memref<2x16x128xf32, #tpu.memory_space<vmem>>, vector<2x16x128xf32>
    tpu.vector_store %arg6[%c0_26, %c0_27, %c0_28], %29 {strides = array<i32>} : memref<2x16x128xf32, #tpu.memory_space<vmem>>, vector<2x16x128xf32>,
    return
  }
}

</mosaic_0001>

<llo_original>
// kernel: net_forward.1
$region0: #{net_forward.1}
  #allocation0 [shape = 'u32[]', space=smem, size = 0x4, offset = 0x4, fixed_abs, tag = 'smem constant byte address 0x4 - core index']
  #allocation1 [shape = 'u32[72,128]{1,0:T(1,128)}', space=vmem, size = 0x9000, scoped, tag = 'internal scratch']
  #allocation2 [shape = 'f32[2,18,128]{2,1,0:T(8,128)}', space=vmem, size = 0x6000, scoped, tag = 'scratch operand']
  %s0 = inlined_call_operand.vmem [shape: f32[32,256], index: 0, kind: input, shape index: {}]
  %s1 = inlined_call_operand.vmem [shape: f32[256,128], index: 1, kind: input, shape index: {}]
  %s2 = inlined_call_operand.vmem [shape: f32[1,128], index: 2, kind: input, shape index: {}]
  %s3 = inlined_call_operand.vmem [shape: f32[384,128], index: 3, kind: input, shape index: {}]
  %s4 = inlined_call_operand.vmem [shape: f32[1,128], index: 4, kind: input, shape index: {}]
  %s5 = inlined_call_operand.vmem [shape: f32[2,16,128], index: 5, kind: output, shape index: {0}]
  %s6 = inlined_call_operand.vmem [shape: f32[2,16,128], index: 6, kind: output, shape index: {1}]
  %7 = xla_tuple %s5, %s6
  %s8 = sld [smem:[#allocation0]]
  $region38: #{net_forward.1} parent=0
    _
  %s10 = ssub.s32 1, %s8
  %s11 = scalar_select 0, %s10, %s8
  // Predicated region
  $region2: #{net_forward.1} parent=0 // pred_check
    _
  $region3: #{net_forward.1} parent=0 // pred_check_branch
    %13 = sbr.rel (0) target = $region5
  $region4: #{net_forward.1} parent=0 // pred_region
    _
  $region5: #{net_forward.1} parent=0 // pred_fallthru
    _
  // Predicated region
  $region6: #{net_forward.1} parent=0 // pred_check
    _
  $region7: #{net_forward.1} parent=0 // pred_check_branch
    %15 = sbr.rel (0) target = $region9
  $region8: #{net_forward.1} parent=0 // pred_region
    _
  $region9: #{net_forward.1} parent=0 // pred_fallthru
    _
  // Predicated region
  $region10: #{net_forward.1} parent=0 // pred_check
    _
  $region11: #{net_forward.1} parent=0 // pred_check_branch
    %17 = sbr.rel (0) target = $region13
  $region12: #{net_forward.1} parent=0 // pred_region
    _
  $region13: #{net_forward.1} parent=0 // pred_fallthru
    _
  // Predicated region
  $region14: #{net_forward.1} parent=0 // pred_check
    _
  $region15: #{net_forward.1} parent=0 // pred_check_branch
    %19 = sbr.rel (0) target = $region17
  $region16: #{net_forward.1} parent=0 // pred_region
    _
  $region17: #{net_forward.1} parent=0 // pred_fallthru
    _
  // Predicated region
  $region18: #{net_forward.1} parent=0 // pred_check
    _
  $region19: #{net_forward.1} parent=0 // pred_check_branch
    %21 = sbr.rel (0) target = $region21
  $region20: #{net_forward.1} parent=0 // pred_region
    _
  $region21: #{net_forward.1} parent=0 // pred_fallthru
    _
  %v22 = vld [vmem:[%s0] sm:$0xff]
  %v23 = vld [vmem:[%s0 + $0x8] sm:$0xff]
  %v24 = vld [vmem:[%s0 + $0x10] sm:$0xff]
  %v25 = vld [vmem:[%s0 + $0x18] sm:$0xff]
  %v26 = vld [vmem:[%s0 + $0x20] sm:$0xff]
  %v27 = vld [vmem:[%s0 + $0x28] sm:$0xff]
  %v28 = vld [vmem:[%s0 + $0x30] sm:$0xff]
  %v29 = vld [vmem:[%s0 + $0x38] sm:$0xff]
  %v30 = vld [vmem:[%s1] sm:$0xff]
  %v31 = vld [vmem:[%s1 + $0x8] sm:$0xff]
  %v32 = vld [vmem:[%s1 + $0x10] sm:$0xff]
  %v33 = vld [vmem:[%s1 + $0x18] sm:$0xff]
  %v34 = vld [vmem:[%s1 + $0x20] sm:$0xff]
  %v35 = vld [vmem:[%s1 + $0x28] sm:$0xff]
  %v36 = vld [vmem:[%s1 + $0x30] sm:$0xff]
  %v37 = vld [vmem:[%s1 + $0x38] sm:$0xff]
  %v38 = vld [vmem:[%s1 + $0x40] sm:$0xff]
  %v39 = vld [vmem:[%s1 + $0x48] sm:$0xff]
  %v40 = vld [vmem:[%s1 + $0x50] sm:$0xff]
  %v41 = vld [vmem:[%s1 + $0x58] sm:$0xff]
  %v42 = vld [vmem:[%s1 + $0x60] sm:$0xff]
  %v43 = vld [vmem:[%s1 + $0x68] sm:$0xff]
  %v44 = vld [vmem:[%s1 + $0x70] sm:$0xff]
  %v45 = vld [vmem:[%s1 + $0x78] sm:$0xff]
  %v46 = vld [vmem:[%s1 + $0x80] sm:$0xff]
  %v47 = vld [vmem:[%s1 + $0x88] sm:$0xff]
  %v48 = vld [vmem:[%s1 + $0x90] sm:$0xff]
  %v49 = vld [vmem:[%s1 + $0x98] sm:$0xff]
  %v50 = vld [vmem:[%s1 + $0xa0] sm:$0xff]
  %v51 = vld [vmem:[%s1 + $0xa8] sm:$0xff]
  %v52 = vld [vmem:[%s1 + $0xb0] sm:$0xff]
  %v53 = vld [vmem:[%s1 + $0xb8] sm:$0xff]
  %v54 = vld [vmem:[%s1 + $0xc0] sm:$0xff]
  %v55 = vld [vmem:[%s1 + $0xc8] sm:$0xff]
  %v56 = vld [vmem:[%s1 + $0xd0] sm:$0xff]
  %v57 = vld [vmem:[%s1 + $0xd8] sm:$0xff]
  %v58 = vld [vmem:[%s1 + $0xe0] sm:$0xff]
  %v59 = vld [vmem:[%s1 + $0xe8] sm:$0xff]
  %v60 = vld [vmem:[%s1 + $0xf0] sm:$0xff]
  %v61 = vld [vmem:[%s1 + $0xf8] sm:$0xff]
  %v62 = vld [vmem:[%s2] sm:$0x1]
  %v64 = vperm.slane %v62, 0
  %66 = vmatpush.msra.mxu0 %v45
  %67 = vmatpush.msra.mxu0 %v44
  %68 = vmatpush.msra.mxu0 %v43
  %69 = vmatpush.msra.mxu0 %v42
  %70 = vmatpush.msra.mxu0 %v41
  %71 = vmatpush.msra.mxu0 %v40
  %72 = vmatpush.msra.mxu0 %v39
  %73 = vmatpush.msra.mxu0 %v38
  %74 = vmatpush.msra.mxu0 %v37
  %75 = vmatpush.msra.mxu0 %v36
  %76 = vmatpush.msra.mxu0 %v35
  %77 = vmatpush.msra.mxu0 %v34
  %78 = vmatpush.msra.mxu0 %v33
  %79 = vmatpush.msra.mxu0 %v32
  %80 = vmatpush.msra.mxu0 %v31
  %81 = vmatpush.msra.mxu0 %v30
  %82 = vmatmul.f32.gmra.mxu0 %v22
  %v83 = vpop.f32.mrf.mxu0
  %v84 = vadd.f32 %v64, %v83
  %85 = vmatmul.f32.gmra.mxu0 %v24
  %v86 = vpop.f32.mrf.mxu0
  %v87 = vadd.f32 %v64, %v86
  %88 = vmatmul.f32.gmra.mxu0 %v26
  %v89 = vpop.f32.mrf.mxu0
  %v90 = vadd.f32 %v64, %v89
  %91 = vmatmul.f32.gmra.mxu0 %v28
  %v92 = vpop.f32.mrf.mxu0
  %v93 = vadd.f32 %v64, %v92
  %94 = vdwg.mxu0
  %95 = vmatpush.msra.mxu0 %v61
  %96 = vmatpush.msra.mxu0 %v60
  %97 = vmatpush.msra.mxu0 %v59
  %98 = vmatpush.msra.mxu0 %v58
  %99 = vmatpush.msra.mxu0 %v57
  %100 = vmatpush.msra.mxu0 %v56
  %101 = vmatpush.msra.mxu0 %v55
  %102 = vmatpush.msra.mxu0 %v54
  %103 = vmatpush.msra.mxu0 %v53
  %104 = vmatpush.msra.mxu0 %v52
  %105 = vmatpush.msra.mxu0 %v51
  %106 = vmatpush.msra.mxu0 %v50
  %107 = vmatpush.msra.mxu0 %v49
  %108 = vmatpush.msra.mxu0 %v48
  %109 = vmatpush.msra.mxu0 %v47
  %110 = vmatpush.msra.mxu0 %v46
  %111 = vmatmul.f32.gmra.mxu0 %v23
  %v112 = vpop.f32.mrf.mxu0
  %v113 = vadd.f32 %v84, %v112
  %114 = vmatmul.f32.gmra.mxu0 %v25
  %v115 = vpop.f32.mrf.mxu0
  %v116 = vadd.f32 %v87, %v115
  %117 = vmatmul.f32.gmra.mxu0 %v27
  %v118 = vpop.f32.mrf.mxu0
  %v119 = vadd.f32 %v90, %v118
  %120 = vmatmul.f32.gmra.mxu0 %v29
  %v121 = vpop.f32.mrf.mxu0
  %v122 = vadd.f32 %v93, %v121
  %123 = vdwg.mxu0
  %v124 = vmax.f32 %v113, 0.0
  %v125 = vmax.f32 %v116, 0.0
  %v126 = vmax.f32 %v119, 0.0
  %v127 = vmax.f32 %v122, 0.0
  %128 = vst [vmem:[%s5] sm:$0xff] %v124
  %129 = vst [vmem:[%s5 + $0x8] sm:$0xff] %v125
  %130 = vst [vmem:[%s5 + $0x10] sm:$0xff] %v126
  %131 = vst [vmem:[%s5 + $0x18] sm:$0xff] %v127
  %132 = vst [vmem:[#allocation2] sm:$0x1] 0.0
  %133 = vst [vmem:[#allocation2 + $0x18] sm:$0x1] 0.0
  %134 = vst [vmem:[#allocation2 + $0x11] sm:$0x1] 0.0
  %135 = vst [vmem:[#allocation2 + $0x29] sm:$0x1] 0.0
  %136 = vst [vmem:[#allocation2 + $0x1] sm:$0xff] %v124
  %137 = vst [vmem:[#allocation2 + $0x9] sm:$0xff] %v125
  %138 = vst [vmem:[#allocation2 + $0x19] sm:$0xff] %v126
  %139 = vst [vmem:[#allocation2 + $0x21] sm:$0xff] %v127
  %v140 = vld [vmem:[#allocation2] sm:$0xff]
  %v141 = vld [vmem:[#allocation2 + $0x8] sm:$0xff]
  %v142 = vld [vmem:[#allocation2 + $0x10] sm:$0x3]
  %v143 = vld [vmem:[#allocation2 + $0x18] sm:$0xff]
  %v144 = vld [vmem:[#allocation2 + $0x20] sm:$0xff]
  %v145 = vld [vmem:[#allocation2 + $0x28] sm:$0x3]
  %vm152 = vcmask 1046528
  %v153 = vrot.slane %v140, 1
  %v154 = vrot.slane %v141, 1
  %v155 = vsel %vm152, %v153, %v154
  %v156 = vrot.slane %v142, 1
  %v157 = vsel %vm152, %v154, %v156
  %v158 = vrot.slane %v143, 1
  %v159 = vrot.slane %v144, 1
  %v160 = vsel %vm152, %v158, %v159
  %v161 = vrot.slane %v145, 1
  %v162 = vsel %vm152, %v159, %v161
  %vm167 = vcmask 1045504
  %v168 = vrot.slane %v140, 2
  %v169 = vrot.slane %v141, 2
  %v170 = vsel %vm167, %v168, %v169
  %v171 = vrot.slane %v142, 2
  %v172 = vsel %vm167, %v169, %v171
  %v173 = vrot.slane %v143, 2
  %v174 = vrot.slane %v144, 2
  %v175 = vsel %vm167, %v173, %v174
  %v176 = vrot.slane %v145, 2
  %v177 = vsel %vm167, %v174, %v176
  %v182 = vld [vmem:[%s3] sm:$0xff]
  %v183 = vld [vmem:[%s3 + $0x8] sm:$0xff]
  %v184 = vld [vmem:[%s3 + $0x10] sm:$0xff]
  %v185 = vld [vmem:[%s3 + $0x18] sm:$0xff]
  %v186 = vld [vmem:[%s3 + $0x20] sm:$0xff]
  %v187 = vld [vmem:[%s3 + $0x28] sm:$0xff]
  %v188 = vld [vmem:[%s3 + $0x30] sm:$0xff]
  %v189 = vld [vmem:[%s3 + $0x38] sm:$0xff]
  %v190 = vld [vmem:[%s3 + $0x40] sm:$0xff]
  %v191 = vld [vmem:[%s3 + $0x48] sm:$0xff]
  %v192 = vld [vmem:[%s3 + $0x50] sm:$0xff]
  %v193 = vld [vmem:[%s3 + $0x58] sm:$0xff]
  %v194 = vld [vmem:[%s3 + $0x60] sm:$0xff]
  %v195 = vld [vmem:[%s3 + $0x68] sm:$0xff]
  %v196 = vld [vmem:[%s3 + $0x70] sm:$0xff]
  %v197 = vld [vmem:[%s3 + $0x78] sm:$0xff]
  %v198 = vld [vmem:[%s3 + $0x80] sm:$0xff]
  %v199 = vld [vmem:[%s3 + $0x88] sm:$0xff]
  %v200 = vld [vmem:[%s3 + $0x90] sm:$0xff]
  %v201 = vld [vmem:[%s3 + $0x98] sm:$0xff]
  %v202 = vld [vmem:[%s3 + $0xa0] sm:$0xff]
  %v203 = vld [vmem:[%s3 + $0xa8] sm:$0xff]
  %v204 = vld [vmem:[%s3 + $0xb0] sm:$0xff]
  %v205 = vld [vmem:[%s3 + $0xb8] sm:$0xff]
  %v206 = vld [vmem:[%s3 + $0xc0] sm:$0xff]
  %v207 = vld [vmem:[%s3 + $0xc8] sm:$0xff]
  %v208 = vld [vmem:[%s3 + $0xd0] sm:$0xff]
  %v209 = vld [vmem:[%s3 + $0xd8] sm:$0xff]
  %v210 = vld [vmem:[%s3 + $0xe0] sm:$0xff]
  %v211 = vld [vmem:[%s3 + $0xe8] sm:$0xff]
  %v212 = vld [vmem:[%s3 + $0xf0] sm:$0xff]
  %v213 = vld [vmem:[%s3 + $0xf8] sm:$0xff]
  %v214 = vld [vmem:[%s3 + $0x100] sm:$0xff]
  %v215 = vld [vmem:[%s3 + $0x108] sm:$0xff]
  %v216 = vld [vmem:[%s3 + $0x110] sm:$0xff]
  %v217 = vld [vmem:[%s3 + $0x118] sm:$0xff]
  %v218 = vld [vmem:[%s3 + $0x120] sm:$0xff]
  %v219 = vld [vmem:[%s3 + $0x128] sm:$0xff]
  %v220 = vld [vmem:[%s3 + $0x130] sm:$0xff]
  %v221 = vld [vmem:[%s3 + $0x138] sm:$0xff]
  %v222 = vld [vmem:[%s3 + $0x140] sm:$0xff]
  %v223 = vld [vmem:[%s3 + $0x148] sm:$0xff]
  %v224 = vld [vmem:[%s3 + $0x150] sm:$0xff]
  %v225 = vld [vmem:[%s3 + $0x158] sm:$0xff]
  %v226 = vld [vmem:[%s3 + $0x160] sm:$0xff]
  %v227 = vld [vmem:[%s3 + $0x168] sm:$0xff]
  %v228 = vld [vmem:[%s3 + $0x170] sm:$0xff]
  %v229 = vld [vmem:[%s3 + $0x178] sm:$0xff]
  %v230 = vld [vmem:[%s4] sm:$0x1]
  %v232 = vperm.slane %v230, 0
  %234 = vmatpush.msra.mxu0 %v197
  %235 = vmatpush.msra.mxu0 %v196
  %236 = vmatpush.msra.mxu0 %v195
  %237 = vmatpush.msra.mxu0 %v194
  %238 = vmatpush.msra.mxu0 %v193
  %239 = vmatpush.msra.mxu0 %v192
  %240 = vmatpush.msra.mxu0 %v191
  %241 = vmatpush.msra.mxu0 %v190
  %242 = vmatpush.msra.mxu0 %v189
  %243 = vmatpush.msra.mxu0 %v188
  %244 = vmatpush.msra.mxu0 %v187
  %245 = vmatpush.msra.mxu0 %v186
  %246 = vmatpush.msra.mxu0 %v185
  %247 = vmatpush.msra.mxu0 %v184
  %248 = vmatpush.msra.mxu0 %v183
  %249 = vmatpush.msra.mxu0 %v182
  %250 = vmatmul.f32.gmra.mxu0 %v140
  %v251 = vpop.f32.mrf.mxu0
  %v252 = vadd.f32 %v232, %v251
  %253 = vmatmul.f32.gmra.mxu0 %v141
  %v254 = vpop.f32.mrf.mxu0
  %v255 = vadd.f32 %v232, %v254
  %256 = vmatmul.f32.gmra.mxu0 %v143
  %v257 = vpop.f32.mrf.mxu0
  %v258 = vadd.f32 %v232, %v257
  %259 = vmatmul.f32.gmra.mxu0 %v144
  %v260 = vpop.f32.mrf.mxu0
  %v261 = vadd.f32 %v232, %v260
  %262 = vdwg.mxu0
  %263 = vmatpush.msra.mxu0 %v213
  %264 = vmatpush.msra.mxu0 %v212
  %265 = vmatpush.msra.mxu0 %v211
  %266 = vmatpush.msra.mxu0 %v210
  %267 = vmatpush.msra.mxu0 %v209
  %268 = vmatpush.msra.mxu0 %v208
  %269 = vmatpush.msra.mxu0 %v207
  %270 = vmatpush.msra.mxu0 %v206
  %271 = vmatpush.msra.mxu0 %v205
  %272 = vmatpush.msra.mxu0 %v204
  %273 = vmatpush.msra.mxu0 %v203
  %274 = vmatpush.msra.mxu0 %v202
  %275 = vmatpush.msra.mxu0 %v201
  %276 = vmatpush.msra.mxu0 %v200
  %277 = vmatpush.msra.mxu0 %v199
  %278 = vmatpush.msra.mxu0 %v198
  %279 = vmatmul.f32.gmra.mxu0 %v155
  %v280 = vpop.f32.mrf.mxu0
  %v281 = vadd.f32 %v252, %v280
  %282 = vmatmul.f32.gmra.mxu0 %v157
  %v283 = vpop.f32.mrf.mxu0
  %v284 = vadd.f32 %v255, %v283
  %285 = vmatmul.f32.gmra.mxu0 %v160
  %v286 = vpop.f32.mrf.mxu0
  %v287 = vadd.f32 %v258, %v286
  %288 = vmatmul.f32.gmra.mxu0 %v162
  %v289 = vpop.f32.mrf.mxu0
  %v290 = vadd.f32 %v261, %v289
  %291 = vdwg.mxu0
  %292 = vmatpush.msra.mxu0 %v229
  %293 = vmatpush.msra.mxu0 %v228
  %294 = vmatpush.msra.mxu0 %v227
  %295 = vmatpush.msra.mxu0 %v226
  %296 = vmatpush.msra.mxu0 %v225
  %297 = vmatpush.msra.mxu0 %v224
  %298 = vmatpush.msra.mxu0 %v223
  %299 = vmatpush.msra.mxu0 %v222
  %300 = vmatpush.msra.mxu0 %v221
  %301 = vmatpush.msra.mxu0 %v220
  %302 = vmatpush.msra.mxu0 %v219
  %303 = vmatpush.msra.mxu0 %v218
  %304 = vmatpush.msra.mxu0 %v217
  %305 = vmatpush.msra.mxu0 %v216
  %306 = vmatpush.msra.mxu0 %v215
  %307 = vmatpush.msra.mxu0 %v214
  %308 = vmatmul.f32.gmra.mxu0 %v170
  %v309 = vpop.f32.mrf.mxu0
  %v310 = vadd.f32 %v281, %v309
  %311 = vmatmul.f32.gmra.mxu0 %v172
  %v312 = vpop.f32.mrf.mxu0
  %v313 = vadd.f32 %v284, %v312
  %314 = vmatmul.f32.gmra.mxu0 %v175
  %v315 = vpop.f32.mrf.mxu0
  %v316 = vadd.f32 %v287, %v315
  %317 = vmatmul.f32.gmra.mxu0 %v177
  %v318 = vpop.f32.mrf.mxu0
  %v319 = vadd.f32 %v290, %v318
  %320 = vdwg.mxu0
  %v321 = vmax.f32 %v310, 0.0
  %v322 = vmax.f32 %v313, 0.0
  %v323 = vmax.f32 %v316, 0.0
  %v324 = vmax.f32 %v319, 0.0
  %325 = vst [vmem:[%s6] sm:$0xff] %v321
  %326 = vst [vmem:[%s6 + $0x8] sm:$0xff] %v322
  %327 = vst [vmem:[%s6 + $0x10] sm:$0xff] %v323
  %328 = vst [vmem:[%s6 + $0x18] sm:$0xff] %v324
  // Predicated region
  $region22: #{net_forward.1} parent=0 // pred_check
    _
  $region23: #{net_forward.1} parent=0 // pred_check_branch
    %330 = sbr.rel (0) target = $region25
  $region24: #{net_forward.1} parent=0 // pred_region
    _
  $region25: #{net_forward.1} parent=0 // pred_fallthru
    _
  // Predicated region
  $region26: #{net_forward.1} parent=0 // pred_check
    _
  $region27: #{net_forward.1} parent=0 // pred_check_branch
    %332 = sbr.rel (0) target = $region29
  $region28: #{net_forward.1} parent=0 // pred_region
    _
  $region29: #{net_forward.1} parent=0 // pred_fallthru
    _
  // Predicated region
  $region30: #{net_forward.1} parent=0 // pred_check
    _
  $region31: #{net_forward.1} parent=0 // pred_check_branch
    %334 = sbr.rel (0) target = $region33
  $region32: #{net_forward.1} parent=0 // pred_region
    _
  $region33: #{net_forward.1} parent=0 // pred_fallthru
    _
  // Predicated region
  $region34: #{net_forward.1} parent=0 // pred_check
    _
  $region35: #{net_forward.1} parent=0 // pred_check_branch
    %336 = sbr.rel (0) target = $region37
  $region36: #{net_forward.1} parent=0 // pred_region
    _
  $region37: #{net_forward.1} parent=0 // pred_fallthru
    _

</llo_original>
